<compile_context>
chip_gen: v7x
topology: tpu7x:2x2x1
jax: 0.10.0
libtpu: 0.0.40
codegen_flags: <defaults>
</compile_context>

<pallas_src>
import functools

import jax
import jax.numpy as jnp
from jax import lax
from jax.experimental import pallas as pl
from jax.experimental.pallas import tpu as pltpu


def _rup(x, m):
    return ((x + m - 1) // m) * m


def _leaky_relu(x, slope=0.01):  # nn.LeakyReLU() default negative_slope = 0.01
    return jnp.where(x > 0, x, slope * x)


def medml_kernel(bm_ref,                # SMEM [B, 2] int32 (start, length)  (scalar prefetch)
                 g_ref,                 # VMEM [N_pad, Fin_pad] f32 (full resident)
                 adj_ref,               # VMEM [TN, N_pad] int8 0/1 (row block, streamed)
                 params_ref,            # VMEM packed f32 parameter buffer
                 out_ref,               # VMEM [B, OUT_PAD] f32 (g_vec | pred | 0-pad)
                 h_sc,                  # VMEM [N_pad, H] bf16 scratch
                 f12_sc,                # VMEM [N_pad, 8] f32 scratch (f1 | f2 | 0)
                 f2t_sc,                # VMEM [1, N_pad] f32 scratch (f2 transposed)
                 gvec_sc,               # VMEM [B, H] f32 accumulator
                 lens_sc,               # VMEM [B, 1] f32 accumulator (segment sizes)
                 *, n_batch, tn, fin_p, hidden, mlp,
                 row_a, row_fc, row_tail, out_pad):
    i = pl.program_id(0)
    n_blocks = pl.num_programs(0)

    # ---- grid step 0: node features -> hidden, attention projections ----
    @pl.when(i == 0)
    def _init():
        gvec_sc[...] = jnp.zeros_like(gvec_sc)
        lens_sc[...] = jnp.zeros_like(lens_sc)
        g_b = g_ref[...].astype(jnp.bfloat16)                              # [N, Fin]
        w_b = params_ref[0:fin_p, 0:hidden].astype(jnp.bfloat16)           # [Fin, H]
        h = jnp.dot(g_b, w_b, preferred_element_type=jnp.float32)          # [N, H]
        h_sc[...] = h.astype(jnp.bfloat16)
        # fused a1|a2 projection: one MXU push instead of two 1-lane matmuls
        a12_b = params_ref[row_a:row_a + hidden, 0:8].astype(jnp.bfloat16)
        f12 = jnp.dot(h.astype(jnp.bfloat16), a12_b,
                      preferred_element_type=jnp.float32)                  # [N, 8]
        f12_sc[...] = f12
        f2t_sc[...] = f12[:, 1:2].T                                        # [1, N]

    # ---- per row-block attention + masked softmax + att @ h ----
    row0 = pl.multiple_of(i * tn, tn)
    f1 = f12_sc[pl.ds(row0, tn), 0:1]                                      # [TN, 1]
    e = _leaky_relu(f1 + f2t_sc[...])                                      # [TN, N]

    # adj arrives as 0/1 int8; masked entries are zeroed after exp (equivalent
    # to the -9e15 fill, assuming every row has at least one neighbour/self-loop;
    # the denominator guard keeps isolated / padded rows finite).
    adj_mask = adj_ref[...].astype(jnp.float32)                            # [TN, N]
    m = jnp.max(e, axis=1, keepdims=True)
    p_att = jnp.exp(e - m) * adj_mask
    denom = jnp.sum(p_att, axis=1, keepdims=True)
    att = p_att / jnp.maximum(denom, 1e-30)                                # exact divide
    # dropout p=0.0 -> no-op

    h_prime = jnp.dot(att.astype(jnp.bfloat16), h_sc[...],
                      preferred_element_type=jnp.float32)                  # [TN, H]

    # GATLayer returns elu(h_prime); MedML applies elu once more:
    # elu(elu(x)) = x if x > 0 else exp(exp(x) - 1) - 1
    g_out = jnp.where(h_prime > 0, h_prime,
                      jnp.exp(jnp.exp(h_prime) - 1.0) - 1.0)               # [TN, H]

    # ---- segment readout: exact 0/1 selection mask (bf16 MXU, f32 acc) ----
    gidx = row0 + lax.broadcasted_iota(jnp.int32, (1, tn), 1)              # [1, TN]
    sel_rows = []
    for b in range(n_batch):                                               # static B
        start = bm_ref[b, 0]
        length = bm_ref[b, 1]
        inside = (gidx >= start) & (gidx < start + length)
        sel_rows.append(jnp.where(inside, 1.0, 0.0))
    sel = jnp.concatenate(sel_rows, axis=0)                                # [B, TN] f32
    lens_sc[...] += jnp.sum(sel, axis=1, keepdims=True)                    # exact counts
    gvec_sc[...] += jnp.dot(sel.astype(jnp.bfloat16), g_out.astype(jnp.bfloat16),
                            preferred_element_type=jnp.float32)            # [B, H]

    # ---- last step: mean, MLP head, lane-dense packed output ----
    @pl.when(i == n_blocks - 1)
    def _finish():
        lens = lens_sc[...]
        inv = jnp.where(lens > 0.0, 1.0 / jnp.maximum(lens, 1.0), 0.0)     # exact 1/len
        g_vec = gvec_sc[...] * inv                                         # [B, H]

        fc_w = params_ref[row_fc:row_fc + hidden, 0:mlp]                   # [H, M]
        fc_b = params_ref[row_tail:row_tail + 1, 0:mlp]                    # [1, M]
        fc2_w = params_ref[row_tail + 1:row_tail + 2, 0:mlp]               # [1, M]
        fc2_b = params_ref[row_tail + 2:row_tail + 3, 0:1]                 # [1, 1]

        p1 = jnp.dot(g_vec, fc_w, preferred_element_type=jnp.float32) + fc_b
        p1 = jnp.maximum(p1, 0.0)                                          # relu
        # [B,M] @ [M,1] as a VPU reduction instead of a 1-lane MXU matmul
        p2 = jnp.sum(p1 * fc2_w, axis=-1, keepdims=True) + fc2_b
        pred = jax.nn.sigmoid(p2)                                          # [B, 1]

        zpad = jnp.zeros((n_batch, out_pad - hidden - 1), jnp.float32)
        out_ref[...] = jnp.concatenate([g_vec, pred, zpad], axis=1)        # one lane-dense store


def medml_forward(g, adj, bm, params):
    packed = params["packed"]
    dims = params["dims"]
    fin, fin_p = dims["fin"], dims["fin_p"]
    hidden, mlp = dims["hidden"], dims["mlp"]
    n = g.shape[0]
    n_batch = bm.shape[0]

    # Row-block tile over the attention matrix; tiny graphs run as a single block.
    if n <= 256:
        n_pad = _rup(n, 8)
        tn = n_pad
    else:
        tn = 256
        n_pad = _rup(n, tn)
    out_pad = _rup(hidden + 1, 128)

    # Pad node features / adjacency (padded rows have no neighbours -> contribute 0).
    g_p = jnp.zeros((n_pad, fin_p), jnp.float32).at[:n, :fin].set(g.astype(jnp.float32))
    adj_i8 = jnp.zeros((n_pad, n_pad), jnp.int8).at[:n, :n].set((adj > 0).astype(jnp.int8))

    kernel = functools.partial(
        medml_kernel,
        n_batch=n_batch, tn=tn, fin_p=fin_p, hidden=hidden, mlp=mlp,
        row_a=dims["row_a"], row_fc=dims["row_fc"], row_tail=dims["row_tail"],
        out_pad=out_pad)

    out = pl.pallas_call(
        kernel,
        out_shape=jax.ShapeDtypeStruct((n_batch, out_pad), jnp.float32),
        grid_spec=pltpu.PrefetchScalarGridSpec(
            num_scalar_prefetch=1,                       # bm -> SMEM scalars
            grid=(n_pad // tn,),
            in_specs=[
                pl.BlockSpec((n_pad, fin_p), lambda i, bm_s: (0, 0)),   # g (resident)
                pl.BlockSpec((tn, n_pad), lambda i, bm_s: (i, 0)),      # adj row block (streamed)
                pl.BlockSpec(packed.shape, lambda i, bm_s: (0, 0)),     # packed params (resident)
            ],
            out_specs=pl.BlockSpec((n_batch, out_pad), lambda i, bm_s: (0, 0)),
            scratch_shapes=[
                pltpu.VMEM((n_pad, hidden), jnp.bfloat16),   # h
                pltpu.VMEM((n_pad, 8), jnp.float32),         # f1|f2
                pltpu.VMEM((1, n_pad), jnp.float32),         # f2^T
                pltpu.VMEM((n_batch, hidden), jnp.float32),  # g_vec accumulator
                pltpu.VMEM((n_batch, 1), jnp.float32),       # segment sizes
            ],
        ),
        compiler_params=pltpu.CompilerParams(
            dimension_semantics=("arbitrary",),              # carried accumulators
            vmem_limit_bytes=48 * 1024 * 1024,
        ),
    )(bm, g_p, adj_i8, packed)

    g_vec = out[:, :hidden]
    pred = out[:, hidden:hidden + 1]
    return pred, g_vec


def xavier_normal(key, shape, gain):
    fan_in, fan_out = shape[1], shape[0]  # torch convention for 2-D tensors
    std = gain * jnp.sqrt(2.0 / (fan_in + fan_out))
    return std * jax.random.normal(key, shape, dtype=jnp.float32)


def make_params(key, node_dim, hidden_dim, mlp_dim):
    in_features = node_dim + 1
    ks = jax.random.split(key, 7)
    gain = jnp.sqrt(2.0)  # sqrt(2) for GAT init and calculate_gain('relu')
    W = xavier_normal(ks[0], (in_features, hidden_dim), gain)      # [Fin, H]
    a1 = xavier_normal(ks[1], (hidden_dim, 1), gain)
    a2 = xavier_normal(ks[2], (hidden_dim, 1), gain)
    fc_w = xavier_normal(ks[3], (mlp_dim, hidden_dim), gain)       # torch Linear [out, in]
    fc2_w = xavier_normal(ks[4], (1, mlp_dim), gain)
    # nn.Linear default bias init: U(-1/sqrt(fan_in), 1/sqrt(fan_in))
    fc_b = jax.random.uniform(ks[5], (1, mlp_dim), jnp.float32,
                              -1.0 / jnp.sqrt(hidden_dim * 1.0),
                              1.0 / jnp.sqrt(hidden_dim * 1.0))
    fc2_b = jax.random.uniform(ks[6], (1, 1), jnp.float32,
                               -1.0 / jnp.sqrt(mlp_dim * 1.0),
                               1.0 / jnp.sqrt(mlp_dim * 1.0))

    # ---- single packed parameter buffer (8-row-aligned sections) ----
    fin_p = _rup(in_features, 8)
    row_a = fin_p                                    # a1|a2 section
    row_fc = row_a + _rup(hidden_dim, 8)             # fc.weight^T section
    row_tail = row_fc + _rup(hidden_dim, 8)          # fc.bias / fc_2.weight / fc_2.bias
    rows = row_tail + 8
    cols = max(hidden_dim, mlp_dim, 8)
    buf = jnp.zeros((rows, cols), jnp.float32)
    buf = buf.at[0:in_features, 0:hidden_dim].set(W)
    buf = buf.at[row_a:row_a + hidden_dim, 0:1].set(a1)
    buf = buf.at[row_a:row_a + hidden_dim, 1:2].set(a2)
    buf = buf.at[row_fc:row_fc + hidden_dim, 0:mlp_dim].set(fc_w.T)
    buf = buf.at[row_tail, 0:mlp_dim].set(fc_b[0])
    buf = buf.at[row_tail + 1, 0:mlp_dim].set(fc2_w[0])
    buf = buf.at[row_tail + 2, 0].set(fc2_b[0, 0])

    dims = dict(fin=in_features, fin_p=fin_p, hidden=hidden_dim, mlp=mlp_dim,
                row_a=row_a, row_fc=row_fc, row_tail=row_tail)
    # note: MedML.node_embd is a parameter but is never used in forward(), so it is omitted.
    return {"packed": buf, "dims": dims}


if __name__ == "__main__":
    # small shapes: N=16 nodes, node_dim=8 (-> in_features=9), hidden=32, mlp=16, B=2 graphs
    N, node_dim, hidden_dim, mlp_dim, B = 16, 8, 32, 16, 2

    key = jax.random.PRNGKey(0)
    k_g, k_adj, k_p = jax.random.split(key, 3)

    g = jax.random.normal(k_g, (N, node_dim + 1), dtype=jnp.float32)
    # symmetric adjacency with self loops (every row has >=1 neighbour)
    adj_rand = (jax.random.uniform(k_adj, (N, N)) > 0.5).astype(jnp.float32)
    adj = jnp.maximum(adj_rand, adj_rand.T) + jnp.eye(N, dtype=jnp.float32)
    bm = jnp.array([[0, 8], [8, 8]], dtype=jnp.int32)  # two graphs of 8 nodes each

    params = make_params(k_p, node_dim, hidden_dim, mlp_dim)

    pred, g_vec = medml_forward(g, adj, bm, params)
    jax.block_until_ready((pred, g_vec))

    assert pred.shape == (B, 1) and g_vec.shape == (B, hidden_dim)
    assert bool(jnp.all(jnp.isfinite(pred))) and bool(jnp.all(jnp.isfinite(g_vec)))
    print("KERNEL_OK")
</pallas_src>

<mosaic_0001>
module attributes {stable_mosaic.version = 11 : i64} {
  func.func @medml_kernel(%arg0: i32, %arg1: memref<2x2xi32, #tpu.memory_space<smem>>, %arg2: memref<16x16xf32, #tpu.memory_space<vmem>>, %arg3: memref<16x16xi8, #tpu.memory_space<vmem>>, %arg4: memref<88x32xf32, #tpu.memory_space<vmem>>, %arg5: memref<2x128xf32, #tpu.memory_space<vmem>>, %arg6: memref<16x32xbf16, #tpu.memory_space<vmem>>, %arg7: memref<16x8xf32, #tpu.memory_space<vmem>>, %arg8: memref<1x16xf32, #tpu.memory_space<vmem>>, %arg9: memref<2x32xf32, #tpu.memory_space<vmem>>, %arg10: memref<2x1xf32, #tpu.memory_space<vmem>>) attributes {dimension_semantics = [#tpu.dimension_semantics<arbitrary>], iteration_bounds = array<i64: 1>, scalar_prefetch = 1 : i64, scratch_operands = 5 : i64, tpu.core_type = #tpu.core_type<tc>, window_params = [{pipeline_mode = #tpu.pipeline_mode<synchronous>, transform_indices = @transform_0, window_bounds = array<i64: 16, 16>}, {transform_indices = @transform_1, window_bounds = array<i64: 16, 16>}, {pipeline_mode = #tpu.pipeline_mode<synchronous>, transform_indices = @transform_2, window_bounds = array<i64: 88, 32>}, {pipeline_mode = #tpu.pipeline_mode<synchronous>, transform_indices = @transform_3, window_bounds = array<i64: 2, 128>}]} {
    %c0_i32 = arith.constant 0 : i32
    %0 = arith.cmpi eq, %arg0, %c0_i32 : i32
    %1 = arith.extui %0 : i1 to i32
    %c0_i32_0 = arith.constant 0 : i32
    %2 = arith.cmpi ne, %1, %c0_i32_0 : i32
    scf.if %2 {
      %cst_38 = arith.constant 0.000000e+00 : f32
      %82 = vector.broadcast %cst_38 : f32 to vector<2x32xf32>
      %c0_39 = arith.constant 0 : index
      %c0_40 = arith.constant 0 : index
      %83 = vector.load %arg9[%c0_39, %c0_40] : memref<2x32xf32, #tpu.memory_space<vmem>>, vector<2x32xf32>
      tpu.vector_store %arg9[%c0_39, %c0_40], %82 {strides = array<i32>} : memref<2x32xf32, #tpu.memory_space<vmem>>, vector<2x32xf32>,
      %cst_41 = arith.constant 0.000000e+00 : f32
      %84 = vector.broadcast %cst_41 : f32 to vector<2x1xf32>
      %c0_42 = arith.constant 0 : index
      %c0_43 = arith.constant 0 : index
      %85 = vector.load %arg10[%c0_42, %c0_43] : memref<2x1xf32, #tpu.memory_space<vmem>>, vector<2x1xf32>
      tpu.vector_store %arg10[%c0_42, %c0_43], %84 {strides = array<i32>} : memref<2x1xf32, #tpu.memory_space<vmem>>, vector<2x1xf32>,
      %c0_44 = arith.constant 0 : index
      %c0_45 = arith.constant 0 : index
      %86 = vector.load %arg2[%c0_44, %c0_45] : memref<16x16xf32, #tpu.memory_space<vmem>>, vector<16x16xf32>
      %87 = arith.truncf %86 : vector<16x16xf32> to vector<16x16xbf16>
      %c0_46 = arith.constant 0 : index
      %c0_47 = arith.constant 0 : index
      %88 = vector.load %arg4[%c0_46, %c0_47] : memref<88x32xf32, #tpu.memory_space<vmem>>, vector<16x32xf32>
      %89 = arith.truncf %88 : vector<16x32xf32> to vector<16x32xbf16>
      %cst_48 = arith.constant dense<0.000000e+00> : vector<16x32xf32>
      %90 = tpu.matmul %87, %89, %cst_48 {dimension_numbers = #tpu.dot_dimension_numbers<[1], [0], [0], [1], [0, 0, 1, 1], [], []>} : vector<16x16xbf16>, vector<16x32xbf16>, vector<16x32xf32> -> vector<16x32xf32>
      %91 = arith.truncf %90 : vector<16x32xf32> to vector<16x32xbf16>
      %c0_49 = arith.constant 0 : index
      %c0_50 = arith.constant 0 : index
      %92 = vector.load %arg6[%c0_49, %c0_50] : memref<16x32xbf16, #tpu.memory_space<vmem>>, vector<16x32xbf16>
      tpu.vector_store %arg6[%c0_49, %c0_50], %91 {strides = array<i32>} : memref<16x32xbf16, #tpu.memory_space<vmem>>, vector<16x32xbf16>,
      %c16 = arith.constant 16 : index
      %c0_51 = arith.constant 0 : index
      %93 = vector.load %arg4[%c16, %c0_51] : memref<88x32xf32, #tpu.memory_space<vmem>>, vector<32x8xf32>
      %94 = arith.truncf %93 : vector<32x8xf32> to vector<32x8xbf16>
      %95 = arith.truncf %90 : vector<16x32xf32> to vector<16x32xbf16>
      %cst_52 = arith.constant dense<0.000000e+00> : vector<16x8xf32>
      %96 = tpu.matmul %95, %94, %cst_52 {dimension_numbers = #tpu.dot_dimension_numbers<[1], [0], [0], [1], [0, 0, 1, 1], [], []>} : vector<16x32xbf16>, vector<32x8xbf16>, vector<16x8xf32> -> vector<16x8xf32>
      %c0_53 = arith.constant 0 : index
      %c0_54 = arith.constant 0 : index
      %97 = vector.load %arg7[%c0_53, %c0_54] : memref<16x8xf32, #tpu.memory_space<vmem>>, vector<16x8xf32>
      tpu.vector_store %arg7[%c0_53, %c0_54], %96 {strides = array<i32>} : memref<16x8xf32, #tpu.memory_space<vmem>>, vector<16x8xf32>,
      %98 = vector.extract_strided_slice %96 {offsets = [0, 1], sizes = [16, 1], strides = [1, 1]} : vector<16x8xf32> to vector<16x1xf32>
      %99 = tpu.transpose %98, [1, 0] : vector<16x1xf32> -> vector<1x16xf32>
      %c0_55 = arith.constant 0 : index
      %c0_56 = arith.constant 0 : index
      %100 = vector.load %arg8[%c0_55, %c0_56] : memref<1x16xf32, #tpu.memory_space<vmem>>, vector<1x16xf32>
      tpu.vector_store %arg8[%c0_55, %c0_56], %99 {strides = array<i32>} : memref<1x16xf32, #tpu.memory_space<vmem>>, vector<1x16xf32>,
    } else {
    }
    %c16_i32 = arith.constant 16 : i32
    %3 = arith.muli %arg0, %c16_i32 : i32
    %4 = tpu.assume_multiple %3, 16 : i32
    %5 = arith.index_cast %4 : i32 to index
    %c0 = arith.constant 0 : index
    %6 = vector.load %arg7[%5, %c0] : memref<16x8xf32, #tpu.memory_space<vmem>>, vector<16x1xf32>
    %c0_1 = arith.constant 0 : index
    %c0_2 = arith.constant 0 : index
    %7 = vector.load %arg8[%c0_1, %c0_2] : memref<1x16xf32, #tpu.memory_space<vmem>>, vector<1x16xf32>
    %8 = vector.broadcast %6 : vector<16x1xf32> to vector<16x16xf32>
    %9 = vector.broadcast %7 : vector<1x16xf32> to vector<16x16xf32>
    %10 = arith.addf %8, %9 : vector<16x16xf32>
    %cst = arith.constant 0.000000e+00 : f32
    %11 = vector.broadcast %cst : f32 to vector<16x16xf32>
    %12 = arith.cmpf ogt, %10, %11 : vector<16x16xf32>
    %cst_3 = arith.constant 0.00999999977 : f32
    %13 = vector.broadcast %cst_3 : f32 to vector<16x16xf32>
    %14 = arith.mulf %13, %10 : vector<16x16xf32>
    %15 = arith.select %12, %10, %14 : vector<16x16xi1>, vector<16x16xf32>
    %c0_4 = arith.constant 0 : index
    %c0_5 = arith.constant 0 : index
    %16 = vector.load %arg3[%c0_4, %c0_5] : memref<16x16xi8, #tpu.memory_space<vmem>>, vector<16x16xi8>
    %17 = arith.sitofp %16 : vector<16x16xi8> to vector<16x16xf32>
    %cst_6 = arith.constant dense<0xFF800000> : vector<16xf32>
    %18 = vector.multi_reduction <maximumf>, %15, %cst_6 [1] : vector<16x16xf32> to vector<16xf32>
    %19 = vector.shape_cast %18 : vector<16xf32> to vector<16x1xf32>
    %20 = vector.broadcast %19 : vector<16x1xf32> to vector<16x16xf32>
    %21 = arith.subf %15, %20 : vector<16x16xf32>
    %22 = math.exp %21 : vector<16x16xf32>
    %23 = arith.mulf %22, %17 : vector<16x16xf32>
    %cst_7 = arith.constant dense<0.000000e+00> : vector<16xf32>
    %24 = vector.multi_reduction <add>, %23, %cst_7 [1] : vector<16x16xf32> to vector<16xf32>
    %25 = vector.shape_cast %24 : vector<16xf32> to vector<16x1xf32>
    %cst_8 = arith.constant 1.000000e-30 : f32
    %26 = vector.broadcast %cst_8 : f32 to vector<16x1xf32>
    %27 = arith.maximumf %25, %26 : vector<16x1xf32>
    %28 = vector.broadcast %27 : vector<16x1xf32> to vector<16x16xf32>
    %29 = arith.divf %23, %28 : vector<16x16xf32>
    %30 = arith.truncf %29 : vector<16x16xf32> to vector<16x16xbf16>
    %c0_9 = arith.constant 0 : index
    %c0_10 = arith.constant 0 : index
    %31 = vector.load %arg6[%c0_9, %c0_10] : memref<16x32xbf16, #tpu.memory_space<vmem>>, vector<16x32xbf16>
    %cst_11 = arith.constant dense<0.000000e+00> : vector<16x32xf32>
    %32 = tpu.matmul %30, %31, %cst_11 {dimension_numbers = #tpu.dot_dimension_numbers<[1], [0], [0], [1], [0, 0, 1, 1], [], []>} : vector<16x16xbf16>, vector<16x32xbf16>, vector<16x32xf32> -> vector<16x32xf32>
    %cst_12 = arith.constant 0.000000e+00 : f32
    %33 = vector.broadcast %cst_12 : f32 to vector<16x32xf32>
    %34 = arith.cmpf ogt, %32, %33 : vector<16x32xf32>
    %35 = math.exp %32 : vector<16x32xf32>
    %cst_13 = arith.constant 1.000000e+00 : f32
    %36 = vector.broadcast %cst_13 : f32 to vector<16x32xf32>
    %37 = arith.subf %35, %36 : vector<16x32xf32>
    %38 = math.exp %37 : vector<16x32xf32>
    %cst_14 = arith.constant 1.000000e+00 : f32
    %39 = vector.broadcast %cst_14 : f32 to vector<16x32xf32>
    %40 = arith.subf %38, %39 : vector<16x32xf32>
    %41 = arith.select %34, %32, %40 : vector<16x32xi1>, vector<16x32xf32>
    %42 = tpu.iota {dimensions = array<i32: 1>} : vector<1x16xi32>
    %43 = vector.broadcast %4 : i32 to vector<1x16xi32>
    %44 = arith.addi %43, %42 : vector<1x16xi32>
    %c0_15 = arith.constant 0 : index
    %c0_16 = arith.constant 0 : index
    %45 = memref.load %arg1[%c0_15, %c0_16] : memref<2x2xi32, #tpu.memory_space<smem>>
    %c0_17 = arith.constant 0 : index
    %c1 = arith.constant 1 : index
    %46 = memref.load %arg1[%c0_17, %c1] : memref<2x2xi32, #tpu.memory_space<smem>>
    %47 = vector.broadcast %45 : i32 to vector<1x16xi32>
    %48 = arith.cmpi sge, %44, %47 : vector<1x16xi32>
    %49 = arith.addi %45, %46 : i32
    %50 = vector.broadcast %49 : i32 to vector<1x16xi32>
    %51 = arith.cmpi slt, %44, %50 : vector<1x16xi32>
    %52 = arith.andi %48, %51 : vector<1x16xi1>
    %cst_18 = arith.constant 1.000000e+00 : f32
    %cst_19 = arith.constant 0.000000e+00 : f32
    %53 = vector.broadcast %cst_18 : f32 to vector<1x16xf32>
    %54 = vector.broadcast %cst_19 : f32 to vector<1x16xf32>
    %55 = arith.select %52, %53, %54 : vector<1x16xi1>, vector<1x16xf32>
    %c1_20 = arith.constant 1 : index
    %c0_21 = arith.constant 0 : index
    %56 = memref.load %arg1[%c1_20, %c0_21] : memref<2x2xi32, #tpu.memory_space<smem>>
    %c1_22 = arith.constant 1 : index
    %c1_23 = arith.constant 1 : index
    %57 = memref.load %arg1[%c1_22, %c1_23] : memref<2x2xi32, #tpu.memory_space<smem>>
    %58 = vector.broadcast %56 : i32 to vector<1x16xi32>
    %59 = arith.cmpi sge, %44, %58 : vector<1x16xi32>
    %60 = arith.addi %56, %57 : i32
    %61 = vector.broadcast %60 : i32 to vector<1x16xi32>
    %62 = arith.cmpi slt, %44, %61 : vector<1x16xi32>
    %63 = arith.andi %59, %62 : vector<1x16xi1>
    %cst_24 = arith.constant 1.000000e+00 : f32
    %cst_25 = arith.constant 0.000000e+00 : f32
    %64 = vector.broadcast %cst_24 : f32 to vector<1x16xf32>
    %65 = vector.broadcast %cst_25 : f32 to vector<1x16xf32>
    %66 = arith.select %63, %64, %65 : vector<1x16xi1>, vector<1x16xf32>
    %67 = tpu.concatenate %55, %66 in 0 : vector<1x16xf32>, vector<1x16xf32> -> vector<2x16xf32>
    %c0_26 = arith.constant 0 : index
    %c0_27 = arith.constant 0 : index
    %68 = vector.load %arg10[%c0_26, %c0_27] : memref<2x1xf32, #tpu.memory_space<vmem>>, vector<2x1xf32>
    %cst_28 = arith.constant dense<0.000000e+00> : vector<2xf32>
    %69 = vector.multi_reduction <add>, %67, %cst_28 [1] : vector<2x16xf32> to vector<2xf32>
    %70 = vector.shape_cast %69 : vector<2xf32> to vector<2x1xf32>
    %71 = arith.addf %68, %70 : vector<2x1xf32>
    %c0_29 = arith.constant 0 : index
    %c0_30 = arith.constant 0 : index
    %72 = vector.load %arg10[%c0_29, %c0_30] : memref<2x1xf32, #tpu.memory_space<vmem>>, vector<2x1xf32>
    tpu.vector_store %arg10[%c0_29, %c0_30], %71 {strides = array<i32>} : memref<2x1xf32, #tpu.memory_space<vmem>>, vector<2x1xf32>,
    %c0_31 = arith.constant 0 : index
    %c0_32 = arith.constant 0 : index
    %73 = vector.load %arg9[%c0_31, %c0_32] : memref<2x32xf32, #tpu.memory_space<vmem>>, vector<2x32xf32>
    %74 = arith.truncf %67 : vector<2x16xf32> to vector<2x16xbf16>
    %75 = arith.truncf %41 : vector<16x32xf32> to vector<16x32xbf16>
    %cst_33 = arith.constant dense<0.000000e+00> : vector<2x32xf32>
    %76 = tpu.matmul %74, %75, %cst_33 {dimension_numbers = #tpu.dot_dimension_numbers<[1], [0], [0], [1], [0, 0, 1, 1], [], []>} : vector<2x16xbf16>, vector<16x32xbf16>, vector<2x32xf32> -> vector<2x32xf32>
    %77 = arith.addf %73, %76 : vector<2x32xf32>
    %c0_34 = arith.constant 0 : index
    %c0_35 = arith.constant 0 : index
    %78 = vector.load %arg9[%c0_34, %c0_35] : memref<2x32xf32, #tpu.memory_space<vmem>>, vector<2x32xf32>
    tpu.vector_store %arg9[%c0_34, %c0_35], %77 {strides = array<i32>} : memref<2x32xf32, #tpu.memory_space<vmem>>, vector<2x32xf32>,
    %c0_i32_36 = arith.constant 0 : i32
    %79 = arith.cmpi eq, %arg0, %c0_i32_36 : i32
    %80 = arith.extui %79 : i1 to i32
    %c0_i32_37 = arith.constant 0 : i32
    %81 = arith.cmpi ne, %80, %c0_i32_37 : i32
    scf.if %81 {
      %c0_38 = arith.constant 0 : index
      %c0_39 = arith.constant 0 : index
      %82 = vector.load %arg10[%c0_38, %c0_39] : memref<2x1xf32, #tpu.memory_space<vmem>>, vector<2x1xf32>
      %cst_40 = arith.constant 0.000000e+00 : f32
      %83 = vector.broadcast %cst_40 : f32 to vector<2x1xf32>
      %84 = arith.cmpf ogt, %82, %83 : vector<2x1xf32>
      %cst_41 = arith.constant 1.000000e+00 : f32
      %85 = vector.broadcast %cst_41 : f32 to vector<2x1xf32>
      %86 = arith.maximumf %82, %85 : vector<2x1xf32>
      %cst_42 = arith.constant 1.000000e+00 : f32
      %87 = vector.broadcast %cst_42 : f32 to vector<2x1xf32>
      %88 = arith.divf %87, %86 : vector<2x1xf32>
      %cst_43 = arith.constant 0.000000e+00 : f32
      %89 = vector.broadcast %cst_43 : f32 to vector<2x1xf32>
      %90 = arith.select %84, %88, %89 : vector<2x1xi1>, vector<2x1xf32>
      %c0_44 = arith.constant 0 : index
      %c0_45 = arith.constant 0 : index
      %91 = vector.load %arg9[%c0_44, %c0_45] : memref<2x32xf32, #tpu.memory_space<vmem>>, vector<2x32xf32>
      %92 = vector.broadcast %90 : vector<2x1xf32> to vector<2x32xf32>
      %93 = arith.mulf %91, %92 : vector<2x32xf32>
      %c48 = arith.constant 48 : index
      %c0_46 = arith.constant 0 : index
      %94 = vector.load %arg4[%c48, %c0_46] : memref<88x32xf32, #tpu.memory_space<vmem>>, vector<32x16xf32>
      %c80 = arith.constant 80 : index
      %c0_47 = arith.constant 0 : index
      %95 = vector.load %arg4[%c80, %c0_47] : memref<88x32xf32, #tpu.memory_space<vmem>>, vector<1x16xf32>
      %c81 = arith.constant 81 : index
      %c0_48 = arith.constant 0 : index
      %96 = vector.load %arg4[%c81, %c0_48] : memref<88x32xf32, #tpu.memory_space<vmem>>, vector<1x16xf32>
      %c82 = arith.constant 82 : index
      %c0_49 = arith.constant 0 : index
      %97 = vector.load %arg4[%c82, %c0_49] : memref<88x32xf32, #tpu.memory_space<vmem>>, vector<1x1xf32>
      %cst_50 = arith.constant dense<0.000000e+00> : vector<2x16xf32>
      %98 = tpu.matmul %93, %94, %cst_50 {dimension_numbers = #tpu.dot_dimension_numbers<[1], [0], [0], [1], [0, 0, 1, 1], [], []>} : vector<2x32xf32>, vector<32x16xf32>, vector<2x16xf32> -> vector<2x16xf32>
      %99 = vector.broadcast %95 : vector<1x16xf32> to vector<2x16xf32>
      %100 = arith.addf %98, %99 : vector<2x16xf32>
      %cst_51 = arith.constant 0.000000e+00 : f32
      %101 = vector.broadcast %cst_51 : f32 to vector<2x16xf32>
      %102 = arith.maximumf %100, %101 : vector<2x16xf32>
      %103 = vector.broadcast %96 : vector<1x16xf32> to vector<2x16xf32>
      %104 = arith.mulf %102, %103 : vector<2x16xf32>
      %cst_52 = arith.constant dense<0.000000e+00> : vector<2xf32>
      %105 = vector.multi_reduction <add>, %104, %cst_52 [1] : vector<2x16xf32> to vector<2xf32>
      %106 = vector.shape_cast %105 : vector<2xf32> to vector<2x1xf32>
      %107 = vector.broadcast %97 : vector<1x1xf32> to vector<2x1xf32>
      %108 = arith.addf %106, %107 : vector<2x1xf32>
      %109 = arith.negf %108 : vector<2x1xf32>
      %110 = math.exp %109 : vector<2x1xf32>
      %cst_53 = arith.constant 1.000000e+00 : f32
      %111 = vector.broadcast %cst_53 : f32 to vector<2x1xf32>
      %112 = arith.addf %111, %110 : vector<2x1xf32>
      %113 = arith.divf %111, %112 : vector<2x1xf32>
      %cst_54 = arith.constant 0.000000e+00 : f32
      %114 = vector.broadcast %cst_54 : f32 to vector<2x95xf32>
      %115 = tpu.concatenate %93, %113, %114 in 1 : vector<2x32xf32>, vector<2x1xf32>, vector<2x95xf32> -> vector<2x128xf32>
      %c0_55 = arith.constant 0 : index
      %c0_56 = arith.constant 0 : index
      %116 = vector.load %arg5[%c0_55, %c0_56] : memref<2x128xf32, #tpu.memory_space<vmem>>, vector<2x128xf32>
      tpu.vector_store %arg5[%c0_55, %c0_56], %115 {strides = array<i32>} : memref<2x128xf32, #tpu.memory_space<vmem>>, vector<2x128xf32>,
    } else {
    }
    return
  }
  func.func @transform_0(%arg0: i32, %arg1: memref<2x2xi32, #tpu.memory_space<smem>>) -> (i32, i32) {
    %c0_i32 = arith.constant 0 : i32
    %c0_i32_0 = arith.constant 0 : i32
    %c0_i32_1 = arith.constant 0 : i32
    return %c0_i32, %c0_i32_0 : i32, i32
  }
  func.func @transform_1(%arg0: i32, %arg1: memref<2x2xi32, #tpu.memory_space<smem>>) -> (i32, i32) {
    %c0_i32 = arith.constant 0 : i32
    %c0_i32_0 = arith.constant 0 : i32
    return %arg0, %c0_i32 : i32, i32
  }
  func.func @transform_2(%arg0: i32, %arg1: memref<2x2xi32, #tpu.memory_space<smem>>) -> (i32, i32) {
    %c0_i32 = arith.constant 0 : i32
    %c0_i32_0 = arith.constant 0 : i32
    %c0_i32_1 = arith.constant 0 : i32
    return %c0_i32, %c0_i32_0 : i32, i32
  }
  func.func @transform_3(%arg0: i32, %arg1: memref<2x2xi32, #tpu.memory_space<smem>>) -> (i32, i32) {
    %c0_i32 = arith.constant 0 : i32
    %c0_i32_0 = arith.constant 0 : i32
    %c0_i32_1 = arith.constant 0 : i32
    return %c0_i32, %c0_i32_0 : i32, i32
  }
}

</mosaic_0001>

<llo_original>
// kernel: tpu_custom_call.1
$region0: #{tpu_custom_call.1}
  #allocation0 [shape = 'u32[]', space=smem, size = 0x4, offset = 0x4, fixed_abs, tag = 'smem constant byte address 0x4 - core index']
  #allocation1 [shape = 'u32[144,128]{1,0:T(1,128)}', space=vmem, size = 0x12000, scoped, tag = 'internal scratch']
  #allocation2 [shape = 'bf16[16,32]{1,0:T(16,128)(2,1)}', space=vmem, size = 0x1000, scoped, tag = 'scratch operand']
  #allocation3 [shape = 'f32[16,8]{1,0:T(8,128)}', space=vmem, size = 0x2000, scoped, tag = 'scratch operand']
  #allocation4 [shape = 'f32[1,16]{1,0:T(1,128)}', space=vmem, size = 0x200, scoped, tag = 'scratch operand']
  #allocation5 [shape = 'f32[2,32]{1,0:T(2,128)}', space=vmem, size = 0x400, scoped, tag = 'scratch operand']
  #allocation6 [shape = 'f32[2,1]{1,0:T(2,128)}', space=vmem, size = 0x400, scoped, tag = 'scratch operand']
  #allocation7 [shape = 's32[1]{0}', space=sflag, size = 0x4, scoped, tag = 'scoped memory for tpu_custom_call.1']
  #allocation8 [shape = 'u8[1024]{0}', space=smem, size = 0x400, scoped, tag = 'prefetched SMEM operand 0']
  %s0 = inlined_call_operand.vmem [shape: s32[2,2], index: 0, kind: input, shape index: {}]
  %s1 = inlined_call_operand.vmem [shape: f32[16,16], index: 1, kind: input, shape index: {}]
  %s2 = inlined_call_operand.vmem [shape: s8[16,16], index: 2, kind: input, shape index: {}]
  %s3 = inlined_call_operand.vmem [shape: f32[88,32], index: 3, kind: input, shape index: {}]
  %s4 = inlined_call_operand.hbm [shape: f32[2,128], index: 4, kind: output, shape index: {}]
  %s5 = sld [smem:[#allocation0]]
  $region30: #{tpu_custom_call.1} parent=0
    _
  %s7 = ssub.s32 1, %s5
  %s8 = scalar_select 0, %s7, %s5
  %s9 = sshll.u32 %s0, 4
  %s10 = int_to_ptr.vmem [resolvable:$true] %s9
  %12 = dma.vmem_to_smem %s10, 32, [#allocation8], [#allocation7]
  %13 = dma.done [#allocation7], 32
  %14 = sfence
  $region1: #{tpu_custom_call.1} parent=0
    #allocation9 [shape = 'u8[1024]{0}', space=vmem, size = 0x400, scoped, tag = 'output window, operand 0, single buffered']
    #allocation10 [shape = 's32[1]{0}', space=sflag, size = 0x4, scoped, tag = 'scoped memory for tpu_custom_call.1']
    %15 = vsyncpa [#allocation10], 0
    // Predicated region
    $region2: #{tpu_custom_call.1} parent=1 // pred_check
      _
    $region3: #{tpu_custom_call.1} parent=1 // pred_check_branch
      %17 = sbr.rel (0) target = $region5
    $region4: #{tpu_custom_call.1} parent=1 // pred_region
      _
    $region5: #{tpu_custom_call.1} parent=1 // pred_fallthru
      _
    // Predicated region
    $region6: #{tpu_custom_call.1} parent=1 // pred_check
      _
    $region7: #{tpu_custom_call.1} parent=1 // pred_check_branch
      %19 = sbr.rel (0) target = $region9
    $region8: #{tpu_custom_call.1} parent=1 // pred_region
      _
    $region9: #{tpu_custom_call.1} parent=1 // pred_fallthru
      _
    // Predicated region
    $region10: #{tpu_custom_call.1} parent=1 // pred_check
      _
    $region11: #{tpu_custom_call.1} parent=1 // pred_check_branch
      %21 = sbr.rel (0) target = $region13
    $region12: #{tpu_custom_call.1} parent=1 // pred_region
      _
    $region13: #{tpu_custom_call.1} parent=1 // pred_fallthru
      _
    %p23 = scmp.eq.s32.totalorder 0, 0
    // Predicated region
    $region14: #{tpu_custom_call.1} parent=1 // pred_check
      %p24 = pneg %p23
    $region15: #{tpu_custom_call.1} parent=1 // pred_check_branch
      %26 = sbr.rel (%p24) target = $region17
    $region16: #{tpu_custom_call.1} parent=1 // pred_region
      %vm27 = vcmask 254976
      %28 = vst.msk [vmem:[#allocation5] sm:$0x3] %vm27, 0.0
      %vm29 = vcmask 1024
      %30 = vst.msk [vmem:[#allocation6] sm:$0x3] %vm29, 0.0
      %v31 = vld [vmem:[%s1] sm:$0xff]
      %v32 = vld [vmem:[%s1 + $0x8] sm:$0xff]
      %v33 = vpack.c.bf16 %v32, %v31
      %v34 = vld [vmem:[%s3] sm:$0xff]
      %v35 = vld [vmem:[%s3 + $0x8] sm:$0xff]
      %v36 = vpack.c.bf16 %v35, %v34
      %vm37 = vcmask 130048
      %v39 = vsel %vm37, %v33, 0
      %41 = vmatprep.subr.bf16.mxu0 0
      %42 = vmatpush1.bf16.msra.mxu0 %v36
      %43 = vmatprep.subr.bf16.mxu0 0
      %44 = vmatpush1.bf16.msra.mxu0 0
      %45 = vmatprep.subr.bf16.mxu0 0
      %46 = vmatpush1.bf16.msra.mxu0 0
      %47 = vmatprep.subr.bf16.mxu0 0
      %48 = vmatpush1.bf16.msra.mxu0 0
      %49 = vmatprep.subr.bf16.mxu0 0
      %50 = vmatpush1.bf16.msra.mxu0 0
      %51 = vmatprep.subr.bf16.mxu0 0
      %52 = vmatpush1.bf16.msra.mxu0 0
      %53 = vmatprep.subr.bf16.mxu0 0
      %54 = vmatpush1.bf16.msra.mxu0 0
      %55 = vmatprep.subr.bf16.mxu0 0
      %56 = vmatpush1.bf16.msra.mxu0 0
      %57 = vmatprep.subr.bf16.mxu0 0
      %58 = vmatpush1.bf16.msra.mxu0 0
      %59 = vmatprep.subr.bf16.mxu0 0
      %60 = vmatpush1.bf16.msra.mxu0 0
      %61 = vmatprep.subr.bf16.mxu0 0
      %62 = vmatpush1.bf16.msra.mxu0 0
      %63 = vmatprep.subr.bf16.mxu0 0
      %64 = vmatpush1.bf16.msra.mxu0 0
      %65 = vmatprep.subr.bf16.mxu0 0
      %66 = vmatpush1.bf16.msra.mxu0 0
      %67 = vmatprep.subr.bf16.mxu0 0
      %68 = vmatpush1.bf16.msra.mxu0 0
      %69 = vmatprep.subr.bf16.mxu0 0
      %70 = vmatpush1.bf16.msra.mxu0 0
      %71 = vmatprep.subr.bf16.mxu0 0
      %72 = vmatpush1.bf16.msra.mxu0 0
      %73 = vmatprep.mubr.bf16.mxu0 0
      %74 = vmatmul.mubr.bf16.gmra.mrb[0].mxu0 %v39
      %v75 = vpop.f32.mrb[0].mxu0
      %v76 = vadd.f32 0.0, %v75
      %v77 = vpop.f32.mrb[0].mxu0
      %v78 = vpop.f32.mrb[0].mxu0
      %v79 = vadd.f32 0.0, %v78
      %v80 = vpop.f32.mrb[0].mxu0
      %81 = vdwg.mxu0
      %v82 = vpack.c.bf16 %v79, %v76
      %vm83 = vcmask 261120
      %84 = vst.msk [vmem:[#allocation2] sm:$0xff] %vm83, %v82
      %v85 = vld [vmem:[%s3 + $0x10] sm:$0xff]
      %v86 = vld [vmem:[%s3 + $0x18] sm:$0xff]
      %v87 = vld [vmem:[%s3 + $0x20] sm:$0xff]
      %v88 = vld [vmem:[%s3 + $0x28] sm:$0xff]
      %v89 = vpack.c.bf16 %v86, %v85
      %v90 = vpack.c.bf16 %v88, %v87
      %v92 = vsel %vm83, %v82, 0
      %94 = vmatprep.subr.bf16.mxu0 0
      %95 = vmatpush1.bf16.msra.mxu0 %v89
      %96 = vmatprep.subr.bf16.mxu0 0
      %97 = vmatpush1.bf16.msra.mxu0 %v90
      %98 = vmatprep.subr.bf16.mxu0 0
      %99 = vmatpush1.bf16.msra.mxu0 0
      %100 = vmatprep.subr.bf16.mxu0 0
      %101 = vmatpush1.bf16.msra.mxu0 0
      %102 = vmatprep.subr.bf16.mxu0 0
      %103 = vmatpush1.bf16.msra.mxu0 0
      %104 = vmatprep.subr.bf16.mxu0 0
      %105 = vmatpush1.bf16.msra.mxu0 0
      %106 = vmatprep.subr.bf16.mxu0 0
      %107 = vmatpush1.bf16.msra.mxu0 0
      %108 = vmatprep.subr.bf16.mxu0 0
      %109 = vmatpush1.bf16.msra.mxu0 0
      %110 = vmatprep.subr.bf16.mxu0 0
      %111 = vmatpush1.bf16.msra.mxu0 0
      %112 = vmatprep.subr.bf16.mxu0 0
      %113 = vmatpush1.bf16.msra.mxu0 0
      %114 = vmatprep.subr.bf16.mxu0 0
      %115 = vmatpush1.bf16.msra.mxu0 0
      %116 = vmatprep.subr.bf16.mxu0 0
      %117 = vmatpush1.bf16.msra.mxu0 0
      %118 = vmatprep.subr.bf16.mxu0 0
      %119 = vmatpush1.bf16.msra.mxu0 0
      %120 = vmatprep.subr.bf16.mxu0 0
      %121 = vmatpush1.bf16.msra.mxu0 0
      %122 = vmatprep.subr.bf16.mxu0 0
      %123 = vmatpush1.bf16.msra.mxu0 0
      %124 = vmatprep.subr.bf16.mxu0 0
      %125 = vmatpush1.bf16.msra.mxu0 0
      %126 = vmatprep.mubr.bf16.mxu0 0
      %127 = vmatmul.mubr.bf16.gmra.mrb[0].mxu0 %v92
      %v128 = vpop.f32.mrb[0].mxu0
      %v129 = vadd.f32 0.0, %v128
      %v130 = vpop.f32.mrb[0].mxu0
      %v131 = vpop.f32.mrb[0].mxu0
      %v132 = vadd.f32 0.0, %v131
      %v133 = vpop.f32.mrb[0].mxu0
      %134 = vdwg.mxu0
      %vm135 = vcmask 64512
      %136 = vst.msk [vmem:[#allocation3] sm:$0xff] %vm135, %v129
      %137 = vst.msk [vmem:[#allocation3 + $0x8] sm:$0xff] %vm135, %v132
      %140 = vrot.lane.b32.xlu0 %v129, 127
      %v141 = vpop.permute.xlu0 %140
      %142 = vrot.lane.b32.xlu0 %v132, 127
      %v143 = vpop.permute.xlu0 %142
      %146 = vxpose.xlu0.b32.start [1/16] %v141, 128
      %147 = vxpose.xlu0.b32.cont [2/16] %v143, 128
      %148 = vxpose.xlu0.b32.cont [3/16] 0.0, 128
      %149 = vxpose.xlu0.b32.cont [4/16] 0.0, 128
      %150 = vxpose.xlu0.b32.cont [5/16] 0.0, 128
      %151 = vxpose.xlu0.b32.cont [6/16] 0.0, 128
      %152 = vxpose.xlu0.b32.cont [7/16] 0.0, 128
      %153 = vxpose.xlu0.b32.cont [8/16] 0.0, 128
      %154 = vxpose.xlu0.b32.cont [9/16] 0.0, 128
      %155 = vxpose.xlu0.b32.cont [10/16] 0.0, 128
      %156 = vxpose.xlu0.b32.cont [11/16] 0.0, 128
      %157 = vxpose.xlu0.b32.cont [12/16] 0.0, 128
      %158 = vxpose.xlu0.b32.cont [13/16] 0.0, 128
      %159 = vxpose.xlu0.b32.cont [14/16] 0.0, 128
      %160 = vxpose.xlu0.b32.cont [15/16] 0.0, 128
      %161 = vxpose.xlu0.b32.end [16/16] 0.0, 128
      %v162 = vpop.trf.xlu0
      %v163 = vpop.trf.xlu0
      %v164 = vpop.trf.xlu0
      %v165 = vpop.trf.xlu0
      %v166 = vpop.trf.xlu0
      %v167 = vpop.trf.xlu0
      %v168 = vpop.trf.xlu0
      %v169 = vpop.trf.xlu0
      %v170 = vpop.trf.xlu0
      %v171 = vpop.trf.xlu0
      %v172 = vpop.trf.xlu0
      %v173 = vpop.trf.xlu0
      %v174 = vpop.trf.xlu0
      %v175 = vpop.trf.xlu0
      %v176 = vpop.trf.xlu0
      %v177 = vpop.trf.xlu0
      %vm178 = vcmask 122880
      %179 = vst.msk [vmem:[#allocation4] sm:$0x1] %vm178, %v162
    $region17: #{tpu_custom_call.1} parent=1 // pred_fallthru
      _
    %s180 = smul.u32 0, 16
    %s181 = scalar_lea.vmem [#allocation3], %s180
    %v182 = vld [vmem:[%s181] sm:$0xff]
    %v183 = vld [vmem:[%s181 + $0x8] sm:$0xff]
    %v184 = vld [vmem:[#allocation4] sm:$0x1]
    %186 = vset.pattern.permute.xlu0 0
    %187 = vperm.xlu0 %186, %v182
    %v188 = vpop.permute.xlu0 %187
    %191 = vset.pattern.permute.xlu0 0
    %192 = vperm.xlu0 %191, %v183
    %v193 = vpop.permute.xlu0 %192
    %v196 = vlaneseq
    %v197 = vshrl.u32 %v196, 7
    %v198 = vsub.s32 0, %v197
    %v199 = vrot.slane %v184, %v198
    %v201 = vadd.f32 %v188, %v199
    %v202 = vadd.f32 %v193, %v199
    %vm203 = vcmp.gt.f32.partialorder %v201, 0.0
    %vm204 = vcmp.gt.f32.partialorder %v202, 0.0
    %v205 = vmul.f32 %v201, 0.01
    %v206 = vmul.f32 %v202, 0.01
    %v207 = vsel %vm203, %v201, %v205
    %v208 = vsel %vm204, %v202, %v206
    %v209 = vld [vmem:[%s2] sm:$0x3]
    %v210 = vld [vmem:[%s2 + $0x2] sm:$0x3]
    %v211 = vunpack.c.0.s8 %v209
    %v212 = vunpack.c.0.s8 %v210
    %v213 = vcvt.s32.f32 %v211
    %v214 = vcvt.s32.f32 %v212
    %vm215 = vcmask 130048
    %v216 = vsel %vm215, %v207, -inf
    %217 = vmax.xlane.f32.xlu0 %v216
    %v218 = vpop.xlane.xlu0 %217
    %v219 = vsel %vm215, %v208, -inf
    %220 = vmax.xlane.f32.xlu0 %v219
    %v221 = vpop.xlane.xlu0 %220
    %v222 = vsub.f32 %v207, %v218
    %v223 = vsub.f32 %v208, %v221
    %v224 = vmul.f32 %v222, 1.442695
    %v225 = vpow.pop %v224
    %v226 = vmul.f32 %v223, 1.442695
    %v227 = vpow.pop %v226
    %v228 = vmul.f32 %v225, %v213
    %v229 = vmul.f32 %v227, %v214
    %v230 = vsel %vm215, %v228, 0.0
    %231 = vadd.xlane.f32.xlu0 %v230
    %v232 = vpop.xlane.xlu0 %231
    %v233 = vsel %vm215, %v229, 0.0
    %234 = vadd.xlane.f32.xlu0 %v233
    %v235 = vpop.xlane.xlu0 %234
    %v236 = vmax.f32 %v232, 1e-30
    %v237 = vmax.f32 %v235, 1e-30
    %v238 = vrcp.pop %v236
    %v239 = vmul.f32 %v228, %v238
    %v240 = vrcp.pop %v237
    %v241 = vmul.f32 %v229, %v240
    %v242 = vpack.c.bf16 %v241, %v239
    %v243 = vld [vmem:[#allocation2] sm:$0xff]
    %v245 = vsel %vm215, %v242, 0
    %247 = vmatprep.subr.bf16.mxu0 0
    %248 = vmatpush1.bf16.msra.mxu0 %v243
    %249 = vmatprep.subr.bf16.mxu0 0
    %250 = vmatpush1.bf16.msra.mxu0 0
    %251 = vmatprep.subr.bf16.mxu0 0
    %252 = vmatpush1.bf16.msra.mxu0 0
    %253 = vmatprep.subr.bf16.mxu0 0
    %254 = vmatpush1.bf16.msra.mxu0 0
    %255 = vmatprep.subr.bf16.mxu0 0
    %256 = vmatpush1.bf16.msra.mxu0 0
    %257 = vmatprep.subr.bf16.mxu0 0
    %258 = vmatpush1.bf16.msra.mxu0 0
    %259 = vmatprep.subr.bf16.mxu0 0
    %260 = vmatpush1.bf16.msra.mxu0 0
    %261 = vmatprep.subr.bf16.mxu0 0
    %262 = vmatpush1.bf16.msra.mxu0 0
    %263 = vmatprep.subr.bf16.mxu0 0
    %264 = vmatpush1.bf16.msra.mxu0 0
    %265 = vmatprep.subr.bf16.mxu0 0
    %266 = vmatpush1.bf16.msra.mxu0 0
    %267 = vmatprep.subr.bf16.mxu0 0
    %268 = vmatpush1.bf16.msra.mxu0 0
    %269 = vmatprep.subr.bf16.mxu0 0
    %270 = vmatpush1.bf16.msra.mxu0 0
    %271 = vmatprep.subr.bf16.mxu0 0
    %272 = vmatpush1.bf16.msra.mxu0 0
    %273 = vmatprep.subr.bf16.mxu0 0
    %274 = vmatpush1.bf16.msra.mxu0 0
    %275 = vmatprep.subr.bf16.mxu0 0
    %276 = vmatpush1.bf16.msra.mxu0 0
    %277 = vmatprep.subr.bf16.mxu0 0
    %278 = vmatpush1.bf16.msra.mxu0 0
    %279 = vmatprep.mubr.bf16.mxu0 0
    %280 = vmatmul.mubr.bf16.gmra.mrb[0].mxu0 %v245
    %v281 = vpop.f32.mrb[0].mxu0
    %v282 = vadd.f32 0.0, %v281
    %v283 = vpop.f32.mrb[0].mxu0
    %v284 = vpop.f32.mrb[0].mxu0
    %v285 = vadd.f32 0.0, %v284
    %v286 = vpop.f32.mrb[0].mxu0
    %287 = vdwg.mxu0
    %vm288 = vcmp.gt.f32.partialorder %v282, 0.0
    %vm289 = vcmp.gt.f32.partialorder %v285, 0.0
    %v290 = vmul.f32 %v282, 1.442695
    %v291 = vpow.pop %v290
    %v292 = vmul.f32 %v285, 1.442695
    %v293 = vpow.pop %v292
    %v294 = vsub.f32 %v291, 1.0
    %v295 = vsub.f32 %v293, 1.0
    %v296 = vmul.f32 %v294, 1.442695
    %v297 = vpow.pop %v296
    %v298 = vmul.f32 %v295, 1.442695
    %v299 = vpow.pop %v298
    %v300 = vsub.f32 %v297, 1.0
    %v301 = vsub.f32 %v299, 1.0
    %v302 = vsel %vm288, %v282, %v300
    %v303 = vsel %vm289, %v285, %v301
    %v304 = vlaneseq
    %v305 = vand.u32 %v304, 127
    %v306 = vstv %s180
    %v307 = vadd.s32 %v306, %v305
    %s308 = sld [smem:[#allocation8]]
    %s309 = sld [smem:[#allocation8 + $0x1]]
    %v310 = vstv %s308
    %vm311 = vcmp.ge.s32.totalorder %v307, %v310
    %s312 = sadd.s32 %s308, %s309
    %v313 = vstv %s312
    %vm314 = vcmp.lt.s32.totalorder %v307, %v313
    %vm315 = vmand %vm311, %vm314
    %v316 = vsel %vm315, 1.0, 0.0
    %s317 = sld [smem:[#allocation8 + $0x80]]
    %s318 = sld [smem:[#allocation8 + $0x81]]
    %v319 = vstv %s317
    %vm320 = vcmp.ge.s32.totalorder %v307, %v319
    %s321 = sadd.s32 %s317, %s318
    %v322 = vstv %s321
    %vm323 = vcmp.lt.s32.totalorder %v307, %v322
    %vm324 = vmand %vm320, %vm323
    %v325 = vsel %vm324, 1.0, 0.0
    %vm326 = vcmask 1040384
    %v327 = vsel %vm326, %v316, %v325
    %v328 = vld [vmem:[#allocation6] sm:$0x3]
    %vm329 = vcmask 123904
    %v330 = vsel %vm329, %v327, 0.0
    %331 = vadd.xlane.f32.xlu0 %v330
    %v332 = vpop.xlane.xlu0 %331
    %v333 = vadd.f32 %v328, %v332
    %vm334 = vcmask 1024
    %335 = vst.msk [vmem:[#allocation6] sm:$0x3] %vm334, %v333
    %v336 = vld [vmem:[#allocation5] sm:$0x3]
    %v337 = vpack.c.bf16 %v327, %v327
    %v338 = vpack.c.bf16 %v303, %v302
    %v340 = vsel %vm215, %v337, 0
    %342 = vmatprep.subr.bf16.mxu0 0
    %343 = vmatpush1.bf16.msra.mxu0 %v338
    %344 = vmatprep.subr.bf16.mxu0 0
    %345 = vmatpush1.bf16.msra.mxu0 0
    %346 = vmatprep.subr.bf16.mxu0 0
    %347 = vmatpush1.bf16.msra.mxu0 0
    %348 = vmatprep.subr.bf16.mxu0 0
    %349 = vmatpush1.bf16.msra.mxu0 0
    %350 = vmatprep.subr.bf16.mxu0 0
    %351 = vmatpush1.bf16.msra.mxu0 0
    %352 = vmatprep.subr.bf16.mxu0 0
    %353 = vmatpush1.bf16.msra.mxu0 0
    %354 = vmatprep.subr.bf16.mxu0 0
    %355 = vmatpush1.bf16.msra.mxu0 0
    %356 = vmatprep.subr.bf16.mxu0 0
    %357 = vmatpush1.bf16.msra.mxu0 0
    %358 = vmatprep.subr.bf16.mxu0 0
    %359 = vmatpush1.bf16.msra.mxu0 0
    %360 = vmatprep.subr.bf16.mxu0 0
    %361 = vmatpush1.bf16.msra.mxu0 0
    %362 = vmatprep.subr.bf16.mxu0 0
    %363 = vmatpush1.bf16.msra.mxu0 0
    %364 = vmatprep.subr.bf16.mxu0 0
    %365 = vmatpush1.bf16.msra.mxu0 0
    %366 = vmatprep.subr.bf16.mxu0 0
    %367 = vmatpush1.bf16.msra.mxu0 0
    %368 = vmatprep.subr.bf16.mxu0 0
    %369 = vmatpush1.bf16.msra.mxu0 0
    %370 = vmatprep.subr.bf16.mxu0 0
    %371 = vmatpush1.bf16.msra.mxu0 0
    %372 = vmatprep.subr.bf16.mxu0 0
    %373 = vmatpush1.bf16.msra.mxu0 0
    %374 = vmatprep.mubr.bf16.mxu0 0
    %375 = vmatmul.mubr.bf16.gmra.mrb[0].mxu0 %v340
    %v376 = vpop.f32.mrb[0].mxu0
    %v377 = vadd.f32 0.0, %v376
    %v378 = vpop.f32.mrb[0].mxu0
    %v379 = vpop.f32.mrb[0].mxu0
    %v380 = vpop.f32.mrb[0].mxu0
    %381 = vdwg.mxu0
    %v382 = vadd.f32 %v336, %v377
    %vm383 = vcmask 254976
    %384 = vst.msk [vmem:[#allocation5] sm:$0x3] %vm383, %v382
    // Predicated region
    $region18: #{tpu_custom_call.1} parent=1 // pred_check
      %p385 = pneg %p23
    $region19: #{tpu_custom_call.1} parent=1 // pred_check_branch
      %387 = sbr.rel (%p385) target = $region21
    $region20: #{tpu_custom_call.1} parent=1 // pred_region
      %v388 = vld [vmem:[#allocation6] sm:$0x3]
      %vm389 = vcmp.gt.f32.partialorder %v388, 0.0
      %v390 = vmax.f32 %v388, 1.0
      %v391 = vrcp.pop %v390
      %v392 = vmul.f32 1.0, %v391
      %v393 = vsel %vm389, %v392, 0.0
      %v394 = vld [vmem:[#allocation5] sm:$0x3]
      %396 = vset.pattern.permute.xlu0 0
      %397 = vperm.xlu0 %396, %v393
      %v398 = vpop.permute.xlu0 %397
      %v400 = vmul.f32 %v394, %v398
      %v401 = vld [vmem:[%s3 + $0x30] sm:$0xff]
      %v402 = vld [vmem:[%s3 + $0x38] sm:$0xff]
      %v403 = vld [vmem:[%s3 + $0x40] sm:$0xff]
      %v404 = vld [vmem:[%s3 + $0x48] sm:$0xff]
      %v405 = vld [vmem:[%s3 + $0x50] sm:$0x1]
      %v406 = vld [vmem:[%s3 + $0x51] sm:$0x1]
      %v407 = vld [vmem:[%s3 + $0x52] sm:$0x1]
      %v408 = vlaneseq
      %v409 = vshrl.u32 %v408, 7
      %v410 = vsub.s32 0, %v409
      %v411 = vrot.slane %v405, %v410
      %vm412 = vcmask 261120
      %v414 = vsel %vm412, %v400, 0
      %416 = vmatprep.subr.mxu0 0.0
      %417 = vmatpush1.msra.mxu0 %v401
      %418 = vmatprep.subr.mxu0 0.0
      %419 = vmatpush1.msra.mxu0 %v402
      %420 = vmatprep.subr.mxu0 0.0
      %421 = vmatpush1.msra.mxu0 %v403
      %422 = vmatprep.subr.mxu0 0.0
      %423 = vmatpush1.msra.mxu0 %v404
      %424 = vmatprep.subr.mxu0 0.0
      %425 = vmatpush1.msra.mxu0 0.0
      %426 = vmatprep.subr.mxu0 0.0
      %427 = vmatpush1.msra.mxu0 0.0
      %428 = vmatprep.subr.mxu0 0.0
      %429 = vmatpush1.msra.mxu0 0.0
      %430 = vmatprep.subr.mxu0 0.0
      %431 = vmatpush1.msra.mxu0 0.0
      %432 = vmatprep.subr.mxu0 0.0
      %433 = vmatpush1.msra.mxu0 0.0
      %434 = vmatprep.subr.mxu0 0.0
      %435 = vmatpush1.msra.mxu0 0.0
      %436 = vmatprep.subr.mxu0 0.0
      %437 = vmatpush1.msra.mxu0 0.0
      %438 = vmatprep.subr.mxu0 0.0
      %439 = vmatpush1.msra.mxu0 0.0
      %440 = vmatprep.subr.mxu0 0.0
      %441 = vmatpush1.msra.mxu0 0.0
      %442 = vmatprep.subr.mxu0 0.0
      %443 = vmatpush1.msra.mxu0 0.0
      %444 = vmatprep.subr.mxu0 0.0
      %445 = vmatpush1.msra.mxu0 0.0
      %446 = vmatprep.subr.mxu0 0.0
      %447 = vmatpush1.msra.mxu0 0.0
      %448 = vmatprep.subr.mxu0 0.0
      %449 = vmatpush1.msra.mxu0 0.0
      %450 = vmatprep.subr.mxu0 0.0
      %451 = vmatpush1.msra.mxu0 0.0
      %452 = vmatprep.subr.mxu0 0.0
      %453 = vmatpush1.msra.mxu0 0.0
      %454 = vmatprep.subr.mxu0 0.0
      %455 = vmatpush1.msra.mxu0 0.0
      %456 = vmatprep.subr.mxu0 0.0
      %457 = vmatpush1.msra.mxu0 0.0
      %458 = vmatprep.subr.mxu0 0.0
      %459 = vmatpush1.msra.mxu0 0.0
      %460 = vmatprep.subr.mxu0 0.0
      %461 = vmatpush1.msra.mxu0 0.0
      %462 = vmatprep.subr.mxu0 0.0
      %463 = vmatpush1.msra.mxu0 0.0
      %464 = vmatprep.subr.mxu0 0.0
      %465 = vmatpush1.msra.mxu0 0.0
      %466 = vmatprep.subr.mxu0 0.0
      %467 = vmatpush1.msra.mxu0 0.0
      %468 = vmatprep.subr.mxu0 0.0
      %469 = vmatpush1.msra.mxu0 0.0
      %470 = vmatprep.subr.mxu0 0.0
      %471 = vmatpush1.msra.mxu0 0.0
      %472 = vmatprep.subr.mxu0 0.0
      %473 = vmatpush1.msra.mxu0 0.0
      %474 = vmatprep.subr.mxu0 0.0
      %475 = vmatpush1.msra.mxu0 0.0
      %476 = vmatprep.subr.mxu0 0.0
      %477 = vmatpush1.msra.mxu0 0.0
      %478 = vmatprep.subr.mxu0 0.0
      %479 = vmatpush1.msra.mxu0 0.0
      %480 = vmatprep.mubr.f32.mxu0 0.0
      %481 = vmatmul.mubr.f32.gmra.mrb[0].mxu0 %v414
      %v482 = vpop.f32.mrb[0].mxu0
      %v483 = vadd.f32 %v411, %v482
      %v484 = vpop.f32.mrb[0].mxu0
      %485 = vdwg.mxu0
      %v486 = vmax.f32 %v483, 0.0
      %v487 = vlaneseq
      %v488 = vshrl.u32 %v487, 7
      %v489 = vsub.s32 0, %v488
      %v490 = vrot.slane %v406, %v489
      %v491 = vmul.f32 %v486, %v490
      %v492 = vsel %vm329, %v491, 0.0
      %493 = vadd.xlane.f32.xlu0 %v492
      %v494 = vpop.xlane.xlu0 %493
      %v495 = vlaneseq
      %v496 = vshrl.u32 %v495, 7
      %v497 = vsub.s32 0, %v496
      %v498 = vrot.slane %v407, %v497
      %v499 = vadd.f32 %v494, %v498
      %v500 = vxor.u32 %v499, 2147483648
      %v501 = vmul.f32 %v500, 1.442695
      %v502 = vpow.pop %v501
      %v503 = vadd.f32 %v502, 1.0
      %v504 = vrcp.pop %v503
      %v505 = vmul.f32 1.0, %v504
      %507 = vrot.lane.b32.xlu0 %v505, 32
      %v508 = vpop.permute.xlu0 %507
      %v510 = vsel %vm412, %v400, %v508
      %vm511 = vcmask 269312
      %v512 = vsel %vm511, %v510, 0.0
      %513 = vst [vmem:[#allocation9] sm:$0x3] %v512
    $region21: #{tpu_custom_call.1} parent=1 // pred_fallthru
      _
    // Predicated region
    $region22: #{tpu_custom_call.1} parent=1 // pred_check
      _
    $region23: #{tpu_custom_call.1} parent=1 // pred_check_branch
      %515 = sbr.rel (0) target = $region25
    $region24: #{tpu_custom_call.1} parent=1 // pred_region
      %s517 = ssub.s32 32, 32
      %518 = vsyncadd [#allocation10], %s517
      %s520 = sshll.u32 [#allocation9], 4
      %s521 = int_to_ptr.vmem [resolvable:$true] %s520
      %523 = dma.vmem_to_hbm [thread:$0]  %s521, 32, %s4, [#allocation10]
    $region25: #{tpu_custom_call.1} parent=1 // pred_fallthru
      _
    // Predicated region
    $region26: #{tpu_custom_call.1} parent=1 // pred_check
      _
    $region27: #{tpu_custom_call.1} parent=1 // pred_check_branch
      %525 = sbr.rel (0) target = $region29
    $region28: #{tpu_custom_call.1} parent=1 // pred_region
      %526 = dma.done [#allocation10], 32
    $region29: #{tpu_custom_call.1} parent=1 // pred_fallthru
      _
    %527 = vsyncpa [#allocation10], 1

</llo_original>
